<compile_context>
chip_gen: v7x
topology: tpu7x:2x2x1
jax: 0.10.0
libtpu: 0.0.40
codegen_flags: <defaults>
</compile_context>

<pallas_src>
import functools

import jax
import jax.numpy as jnp
from jax.experimental import pallas as pl
from jax.experimental.pallas import tpu as pltpu


# -----------------------------------------------------------------------------
# Kernel
# -----------------------------------------------------------------------------
def mlp_kernel(x_ref, w1_ref, b1_ref, w2_ref, b2_ref, w3_ref, b3_ref, o_ref):
    # fc1 + ReLU: bf16 MXU matmul, f32 accumulate.
    x = x_ref[...].astype(jnp.bfloat16)                       # (TB, F) bf16
    h1 = jnp.dot(x, w1_ref[...], preferred_element_type=jnp.float32)
    h1 = jnp.maximum(h1 + b1_ref[...], 0.0)                   # (TB, 128) f32

    # fc2 + ReLU: output dim zero-padded 64 -> 128, so vregs stay fully packed
    # and the padded columns are exactly 0 after ReLU.
    h2 = jnp.dot(h1.astype(jnp.bfloat16), w2_ref[...],
                 preferred_element_type=jnp.float32)
    h2 = jnp.maximum(h2 + b2_ref[...], 0.0)                   # (TB, 128) f32

    # fc3 (N=1): VPU multiply + XLU lane reduction instead of a one-column MXU
    # pass (w3 row is zero-padded, so padded columns drop out of the sum).
    h3 = jnp.sum(h2 * w3_ref[...], axis=-1, keepdims=True) + b3_ref[...]

    # Sigmoid: exp goes to the EUP; the f32 divide at width 1 is negligible.
    o_ref[...] = (1.0 / (1.0 + jnp.exp(-h3))).astype(o_ref.dtype)


# -----------------------------------------------------------------------------
# Wrapper
# -----------------------------------------------------------------------------
def neural_network_forward(x, packed, *, block_batch=256):
    """x: [B, F] float32; packed: output of pack_params()."""
    B, F = x.shape
    w1, b1, w2, b2, w3, b3 = packed

    # Batch tile: multiple of 8 sublanes, capped so it always fits VMEM.
    TB = min(block_batch, pl.cdiv(B, 8) * 8)
    Bp = pl.cdiv(B, TB) * TB
    if Bp != B:
        x = jnp.pad(x, ((0, Bp - B), (0, 0)))
    nb = Bp // TB

    # Advisory cost hint for the XLA scheduler around the custom call.
    flops = 2 * Bp * (F * 128 + 128 * 128) + 2 * Bp * 128
    bytes_accessed = (Bp * F * 4                      # x (f32 in HBM)
                      + (F * 128 + 128 * 128) * 2     # bf16 weights
                      + (128 + 128 + 128 + 1) * 4     # biases + w3 row (f32)
                      + Bp * 4)                       # output
    cost = pl.CostEstimate(flops=flops, transcendentals=Bp,
                           bytes_accessed=bytes_accessed)

    out = pl.pallas_call(
        mlp_kernel,
        out_shape=jax.ShapeDtypeStruct((Bp, 1), jnp.float32),
        grid=(nb,),
        in_specs=[
            pl.BlockSpec((TB, F), lambda i: (i, 0)),       # x: streamed
            pl.BlockSpec((F, 128), lambda i: (0, 0)),      # w1: VMEM-resident
            pl.BlockSpec((1, 128), lambda i: (0, 0)),      # b1
            pl.BlockSpec((128, 128), lambda i: (0, 0)),    # w2 (padded)
            pl.BlockSpec((1, 128), lambda i: (0, 0)),      # b2 (padded)
            pl.BlockSpec((1, 128), lambda i: (0, 0)),      # w3 row (padded)
            pl.BlockSpec((1, 1), lambda i: (0, 0)),        # b3
        ],
        out_specs=pl.BlockSpec((TB, 1), lambda i: (i, 0)),
        compiler_params=pltpu.CompilerParams(
            dimension_semantics=("parallel",),             # 2x on v7x megacore
            vmem_limit_bytes=32 * 1024 * 1024,             # safe on v5e/v6e/v7x
        ),
        cost_estimate=cost,
    )(x, w1, b1, w2, b2, w3, b3)

    return out[:B]


# -----------------------------------------------------------------------------
# Parameters
# -----------------------------------------------------------------------------
def init_params(key, input_size):
    """Deterministic init mimicking nn.Linear's uniform(-1/sqrt(fan_in), +...)."""
    def linear(k, fan_in, fan_out):
        kw, kb = jax.random.split(k)
        bound = 1.0 / jnp.sqrt(fan_in)
        w = jax.random.uniform(kw, (fan_in, fan_out), jnp.float32, -bound, bound)
        b = jax.random.uniform(kb, (1, fan_out), jnp.float32, -bound, bound)
        return w, b

    k1, k2, k3 = jax.random.split(key, 3)
    w1, b1 = linear(k1, input_size, 128)
    w2, b2 = linear(k2, 128, 64)
    w3, b3 = linear(k3, 64, 1)
    return {"w1": w1, "b1": b1, "w2": w2, "b2": b2, "w3": w3, "b3": b3}


def pack_params(params):
    """bf16 matmul weights, fc2/fc3 zero-padded to lane width 128, f32 biases."""
    w1 = params["w1"].astype(jnp.bfloat16)                               # (F,128)
    b1 = params["b1"].astype(jnp.float32)                                # (1,128)
    w2 = jnp.zeros((128, 128), jnp.bfloat16).at[:, :64].set(
        params["w2"].astype(jnp.bfloat16))                               # (128,128)
    b2 = jnp.zeros((1, 128), jnp.float32).at[:, :64].set(
        params["b2"].reshape(1, 64))                                     # (1,128)
    w3 = jnp.zeros((1, 128), jnp.float32).at[:, :64].set(
        params["w3"].reshape(1, 64))                                     # (1,128)
    b3 = params["b3"].reshape(1, 1).astype(jnp.float32)                  # (1,1)
    return w1, b1, w2, b2, w3, b3


# -----------------------------------------------------------------------------
# References
# -----------------------------------------------------------------------------
def reference_forward_f32(x, p):
    """Pure f32 reference of the original PyTorch module."""
    h1 = jnp.maximum(x @ p["w1"] + p["b1"], 0.0)
    h2 = jnp.maximum(h1 @ p["w2"] + p["b2"], 0.0)
    return jax.nn.sigmoid(h2 @ p["w3"] + p["b3"])


def reference_forward_matched(x, packed):
    """Reference computed with the same bf16/padded arithmetic as the kernel."""
    w1, b1, w2, b2, w3, b3 = packed
    h1 = jnp.dot(x.astype(jnp.bfloat16), w1, preferred_element_type=jnp.float32)
    h1 = jnp.maximum(h1 + b1, 0.0)
    h2 = jnp.dot(h1.astype(jnp.bfloat16), w2, preferred_element_type=jnp.float32)
    h2 = jnp.maximum(h2 + b2, 0.0)
    h3 = jnp.sum(h2 * w3, axis=-1, keepdims=True) + b3
    return 1.0 / (1.0 + jnp.exp(-h3))


# -----------------------------------------------------------------------------
# Demo / self-check
# -----------------------------------------------------------------------------
if __name__ == "__main__":
    key = jax.random.PRNGKey(0)
    k_x, k_p = jax.random.split(key)

    batch = 1024          # 4 grid steps with TB=256 -> exercises the pipeline
    input_size = 32
    x = jax.random.normal(k_x, (batch, input_size), jnp.float32)
    params = init_params(k_p, input_size)
    packed = pack_params(params)

    fwd = functools.partial(neural_network_forward, block_batch=256)
    out = jax.block_until_ready(fwd(x, packed))

    assert out.shape == (batch, 1)

    # Exact-arithmetic check against a reference using identical bf16/pad math.
    ref_m = reference_forward_matched(x, packed)
    assert jnp.allclose(out, ref_m, atol=1e-4, rtol=1e-4), float(
        jnp.max(jnp.abs(out - ref_m)))

    # Semantic sanity vs the pure-f32 PyTorch-equivalent forward (bf16 noise).
    ref_f = reference_forward_f32(x, params)
    assert jnp.allclose(out, ref_f, atol=3e-2, rtol=0.0), float(
        jnp.max(jnp.abs(out - ref_f)))

    print("KERNEL_OK")
</pallas_src>

<mosaic_0001>
module attributes {stable_mosaic.version = 11 : i64} {
  func.func @mlp_kernel(%arg0: i32, %arg1: memref<256x32xf32, #tpu.memory_space<vmem>>, %arg2: memref<32x128xbf16, #tpu.memory_space<vmem>>, %arg3: memref<1x128xf32, #tpu.memory_space<vmem>>, %arg4: memref<128x128xbf16, #tpu.memory_space<vmem>>, %arg5: memref<1x128xf32, #tpu.memory_space<vmem>>, %arg6: memref<1x128xf32, #tpu.memory_space<vmem>>, %arg7: memref<1x1xf32, #tpu.memory_space<vmem>>, %arg8: memref<256x1xf32, #tpu.memory_space<vmem>>) attributes {dimension_semantics = [#tpu.dimension_semantics<parallel>], iteration_bounds = array<i64: 4>, scalar_prefetch = 0 : i64, scratch_operands = 0 : i64, tpu.core_type = #tpu.core_type<tc>, window_params = [{transform_indices = @transform_0, window_bounds = array<i64: 256, 32>}, {pipeline_mode = #tpu.pipeline_mode<synchronous>, transform_indices = @transform_1, window_bounds = array<i64: 32, 128>}, {pipeline_mode = #tpu.pipeline_mode<synchronous>, transform_indices = @transform_2, window_bounds = array<i64: 1, 128>}, {pipeline_mode = #tpu.pipeline_mode<synchronous>, transform_indices = @transform_3, window_bounds = array<i64: 128, 128>}, {pipeline_mode = #tpu.pipeline_mode<synchronous>, transform_indices = @transform_4, window_bounds = array<i64: 1, 128>}, {pipeline_mode = #tpu.pipeline_mode<synchronous>, transform_indices = @transform_5, window_bounds = array<i64: 1, 128>}, {pipeline_mode = #tpu.pipeline_mode<synchronous>, transform_indices = @transform_6, window_bounds = array<i64: 1, 1>}, {transform_indices = @transform_7, window_bounds = array<i64: 256, 1>}]} {
    %c0 = arith.constant 0 : index
    %c0_0 = arith.constant 0 : index
    %0 = vector.load %arg1[%c0, %c0_0] : memref<256x32xf32, #tpu.memory_space<vmem>>, vector<256x32xf32>
    %1 = arith.truncf %0 : vector<256x32xf32> to vector<256x32xbf16>
    %c0_1 = arith.constant 0 : index
    %c0_2 = arith.constant 0 : index
    %2 = vector.load %arg2[%c0_1, %c0_2] : memref<32x128xbf16, #tpu.memory_space<vmem>>, vector<32x128xbf16>
    %cst = arith.constant dense<0.000000e+00> : vector<256x128xf32>
    %3 = tpu.matmul %1, %2, %cst {dimension_numbers = #tpu.dot_dimension_numbers<[1], [0], [0], [1], [0, 0, 1, 1], [], []>} : vector<256x32xbf16>, vector<32x128xbf16>, vector<256x128xf32> -> vector<256x128xf32>
    %c0_3 = arith.constant 0 : index
    %c0_4 = arith.constant 0 : index
    %4 = vector.load %arg3[%c0_3, %c0_4] : memref<1x128xf32, #tpu.memory_space<vmem>>, vector<1x128xf32>
    %5 = vector.broadcast %4 : vector<1x128xf32> to vector<256x128xf32>
    %6 = arith.addf %3, %5 : vector<256x128xf32>
    %cst_5 = arith.constant 0.000000e+00 : f32
    %7 = vector.broadcast %cst_5 : f32 to vector<256x128xf32>
    %8 = arith.maximumf %6, %7 : vector<256x128xf32>
    %9 = arith.truncf %8 : vector<256x128xf32> to vector<256x128xbf16>
    %c0_6 = arith.constant 0 : index
    %c0_7 = arith.constant 0 : index
    %10 = vector.load %arg4[%c0_6, %c0_7] : memref<128x128xbf16, #tpu.memory_space<vmem>>, vector<128x128xbf16>
    %cst_8 = arith.constant dense<0.000000e+00> : vector<256x128xf32>
    %11 = tpu.matmul %9, %10, %cst_8 {dimension_numbers = #tpu.dot_dimension_numbers<[1], [0], [0], [1], [0, 0, 1, 1], [], []>} : vector<256x128xbf16>, vector<128x128xbf16>, vector<256x128xf32> -> vector<256x128xf32>
    %c0_9 = arith.constant 0 : index
    %c0_10 = arith.constant 0 : index
    %12 = vector.load %arg5[%c0_9, %c0_10] : memref<1x128xf32, #tpu.memory_space<vmem>>, vector<1x128xf32>
    %13 = vector.broadcast %12 : vector<1x128xf32> to vector<256x128xf32>
    %14 = arith.addf %11, %13 : vector<256x128xf32>
    %cst_11 = arith.constant 0.000000e+00 : f32
    %15 = vector.broadcast %cst_11 : f32 to vector<256x128xf32>
    %16 = arith.maximumf %14, %15 : vector<256x128xf32>
    %c0_12 = arith.constant 0 : index
    %c0_13 = arith.constant 0 : index
    %17 = vector.load %arg6[%c0_12, %c0_13] : memref<1x128xf32, #tpu.memory_space<vmem>>, vector<1x128xf32>
    %18 = vector.broadcast %17 : vector<1x128xf32> to vector<256x128xf32>
    %19 = arith.mulf %16, %18 : vector<256x128xf32>
    %cst_14 = arith.constant dense<0.000000e+00> : vector<256xf32>
    %20 = vector.multi_reduction <add>, %19, %cst_14 [1] : vector<256x128xf32> to vector<256xf32>
    %21 = vector.shape_cast %20 : vector<256xf32> to vector<256x1xf32>
    %c0_15 = arith.constant 0 : index
    %c0_16 = arith.constant 0 : index
    %22 = vector.load %arg7[%c0_15, %c0_16] : memref<1x1xf32, #tpu.memory_space<vmem>>, vector<1x1xf32>
    %23 = vector.broadcast %22 : vector<1x1xf32> to vector<256x1xf32>
    %24 = arith.addf %21, %23 : vector<256x1xf32>
    %cst_17 = arith.constant 0.000000e+00 : f32
    %25 = vector.broadcast %cst_17 : f32 to vector<256x1xf32>
    %26 = arith.subf %25, %24 : vector<256x1xf32>
    %27 = math.exp %26 : vector<256x1xf32>
    %cst_18 = arith.constant 1.000000e+00 : f32
    %28 = vector.broadcast %cst_18 : f32 to vector<256x1xf32>
    %29 = arith.addf %28, %27 : vector<256x1xf32>
    %cst_19 = arith.constant 1.000000e+00 : f32
    %30 = vector.broadcast %cst_19 : f32 to vector<256x1xf32>
    %31 = arith.divf %30, %29 : vector<256x1xf32>
    %c0_20 = arith.constant 0 : index
    %c0_21 = arith.constant 0 : index
    %32 = vector.load %arg8[%c0_20, %c0_21] : memref<256x1xf32, #tpu.memory_space<vmem>>, vector<256x1xf32>
    tpu.vector_store %arg8[%c0_20, %c0_21], %31 {strides = array<i32>} : memref<256x1xf32, #tpu.memory_space<vmem>>, vector<256x1xf32>,
    return
  }
  func.func @transform_0(%arg0: i32) -> (i32, i32) {
    %c0_i32 = arith.constant 0 : i32
    %c0_i32_0 = arith.constant 0 : i32
    return %arg0, %c0_i32 : i32, i32
  }
  func.func @transform_1(%arg0: i32) -> (i32, i32) {
    %c0_i32 = arith.constant 0 : i32
    %c0_i32_0 = arith.constant 0 : i32
    %c0_i32_1 = arith.constant 0 : i32
    return %c0_i32, %c0_i32_0 : i32, i32
  }
  func.func @transform_2(%arg0: i32) -> (i32, i32) {
    %c0_i32 = arith.constant 0 : i32
    %c0_i32_0 = arith.constant 0 : i32
    %c0_i32_1 = arith.constant 0 : i32
    return %c0_i32, %c0_i32_0 : i32, i32
  }
  func.func @transform_3(%arg0: i32) -> (i32, i32) {
    %c0_i32 = arith.constant 0 : i32
    %c0_i32_0 = arith.constant 0 : i32
    %c0_i32_1 = arith.constant 0 : i32
    return %c0_i32, %c0_i32_0 : i32, i32
  }
  func.func @transform_4(%arg0: i32) -> (i32, i32) {
    %c0_i32 = arith.constant 0 : i32
    %c0_i32_0 = arith.constant 0 : i32
    %c0_i32_1 = arith.constant 0 : i32
    return %c0_i32, %c0_i32_0 : i32, i32
  }
  func.func @transform_5(%arg0: i32) -> (i32, i32) {
    %c0_i32 = arith.constant 0 : i32
    %c0_i32_0 = arith.constant 0 : i32
    %c0_i32_1 = arith.constant 0 : i32
    return %c0_i32, %c0_i32_0 : i32, i32
  }
  func.func @transform_6(%arg0: i32) -> (i32, i32) {
    %c0_i32 = arith.constant 0 : i32
    %c0_i32_0 = arith.constant 0 : i32
    %c0_i32_1 = arith.constant 0 : i32
    return %c0_i32, %c0_i32_0 : i32, i32
  }
  func.func @transform_7(%arg0: i32) -> (i32, i32) {
    %c0_i32 = arith.constant 0 : i32
    %c0_i32_0 = arith.constant 0 : i32
    return %arg0, %c0_i32 : i32, i32
  }
}

</mosaic_0001>

<llo_original>
// kernel: tpu_custom_call.1
$region0: #{tpu_custom_call.1}
  #allocation0 [shape = 'u32[]', space=smem, size = 0x4, offset = 0x4, fixed_abs, tag = 'smem constant byte address 0x4 - core index']
  #allocation1 [shape = 'u32[144,128]{1,0:T(1,128)}', space=vmem, size = 0x12000, scoped, tag = 'internal scratch']
  #allocation2 [shape = 'f32[1,1]{1,0:T(1,128)S(1)}', space=vmem, size = 0x200, scoped, tag = 'scoped memory for tpu_custom_call.1']
  %s0 = inlined_call_operand.vmem [shape: f32[1024,32], index: 0, kind: input, shape index: {}]
  %s1 = inlined_call_operand.vmem [shape: bf16[32,128], index: 1, kind: input, shape index: {}]
  %s2 = inlined_call_operand.vmem [shape: f32[1,128], index: 2, kind: input, shape index: {}]
  %s3 = inlined_call_operand.vmem [shape: bf16[128,128], index: 3, kind: input, shape index: {}]
  %s4 = inlined_call_operand.vmem [shape: f32[1,128], index: 4, kind: input, shape index: {}]
  %s5 = inlined_call_operand.vmem [shape: f32[1,128], index: 5, kind: input, shape index: {}]
  %s6 = inlined_call_operand.<no memory space> [shape: f32[1,1], index: 6, kind: input, shape index: {}]
  %s7 = inlined_call_operand.vmem [shape: f32[1024,1], index: 7, kind: output, shape index: {}]
  %s8 = sld [smem:[#allocation0]]
  $region61: #{tpu_custom_call.1} parent=0
    _
  %s10 = ssub.s32 1, %s8
  %s11 = scalar_select 0, %s10, %s8
  %v12 = vstv %s6
  %13 = vst [vmem:[#allocation2] sm:$0x1] %v12
  loop: start=0, step=1, limit=6
  $region2: #{tpu_custom_call.1} parent=0 // loop_pre_header
    _
  $region3: #{tpu_custom_call.1} parent=0 // loop_header
    %s15 = sphi 0, %s19
    %p16 = scmp.ge.s32.totalorder %s15, 6
    %s25 = sphi 0, %s27
    %s28 = sphi 0, %s25
    %s29 = sphi 0, %s28
    %s45 = sphi 0, %s29
    %s49 = sphi 0, %s49
    %s51 = sphi 0, %s49
    %s52 = sphi 0, %s51
    %s66 = sphi 0, %s52
    %s70 = sphi 0, %s70
    %s72 = sphi 0, %s70
    %s73 = sphi 0, %s72
    %s87 = sphi 0, %s73
    %s91 = sphi 0, %s91
    %s93 = sphi 0, %s91
    %s94 = sphi 0, %s93
    %s108 = sphi 0, %s94
    %s112 = sphi 0, %s112
    %s114 = sphi 0, %s112
    %s115 = sphi 0, %s114
    %s129 = sphi 0, %s115
    %s133 = sphi 0, %s133
    %s135 = sphi 0, %s133
    %s136 = sphi 0, %s135
    %s150 = sphi 0, %s136
    %s154 = sphi 0, %s154
    %s156 = sphi 0, %s154
    %s157 = sphi 0, %s156
    %s171 = sphi 0, %s157
    %s177 = sphi 0, %s179
    %s180 = sphi 0, %s177
    %s181 = sphi 0, %s180
    %s197 = sphi 0, %s181
  $region4: #{tpu_custom_call.1} parent=0 // loop_header_branch
    %18 = sbr.rel (%p16) target = $region8
  $region5: #{tpu_custom_call.1} parent=0 // loop_body
    %s20 = ssub.s32 %s15, 1
    %s21 = ssub.s32 %s15, 2
    %s22 = sadd.s32 %s15, 1
    %s23 = ssub.s32 %s15, %s22
    %p24 = scmp.eq.s32.totalorder %s23, 0
    %s26 = sadd.s32 %s25, 1
    %s27 = scalar_select %p24, %s25, %s26
    %p30 = pneg %p24
    %p31 = scmp.eq.s32.totalorder %s15, 3
    %p32 = por %p30, %p31
    %p33 = scmp.ne.s32.totalorder %s25, %s28
    %p34 = scmp.eq.s32.totalorder %s15, 0
    %p35 = por %p33, %p34
    %p36 = scmp.ne.s32.totalorder %s25, %s28
    %p37 = scmp.eq.s32.totalorder %s20, 3
    %p38 = por %p36, %p37
    %p39 = scmp.ne.s32.totalorder %s28, %s29
    %p40 = scmp.eq.s32.totalorder %s20, 0
    %p41 = por %p39, %p40
    %p42 = scmp.ne.s32.totalorder %s28, %s29
    %p43 = scmp.eq.s32.totalorder %s21, 3
    %p44 = por %p42, %p43
    %p46 = scmp.ne.s32.totalorder %s29, %s45
    %p47 = scmp.eq.s32.totalorder %s21, 0
    %p48 = por %p46, %p47
    %s50 = sadd.s32 %s49, 1
    %p53 = scmp.eq.s32.totalorder %s15, 3
    %p54 = scmp.ne.s32.totalorder %s49, %s51
    %p55 = scmp.eq.s32.totalorder %s15, 0
    %p56 = por %p54, %p55
    %p57 = scmp.ne.s32.totalorder %s49, %s51
    %p58 = scmp.eq.s32.totalorder %s20, 3
    %p59 = por %p57, %p58
    %p60 = scmp.ne.s32.totalorder %s51, %s52
    %p61 = scmp.eq.s32.totalorder %s20, 0
    %p62 = por %p60, %p61
    %p63 = scmp.ne.s32.totalorder %s51, %s52
    %p64 = scmp.eq.s32.totalorder %s21, 3
    %p65 = por %p63, %p64
    %p67 = scmp.ne.s32.totalorder %s52, %s66
    %p68 = scmp.eq.s32.totalorder %s21, 0
    %p69 = por %p67, %p68
    %s71 = sadd.s32 %s70, 1
    %p74 = scmp.eq.s32.totalorder %s15, 3
    %p75 = scmp.ne.s32.totalorder %s70, %s72
    %p76 = scmp.eq.s32.totalorder %s15, 0
    %p77 = por %p75, %p76
    %p78 = scmp.ne.s32.totalorder %s70, %s72
    %p79 = scmp.eq.s32.totalorder %s20, 3
    %p80 = por %p78, %p79
    %p81 = scmp.ne.s32.totalorder %s72, %s73
    %p82 = scmp.eq.s32.totalorder %s20, 0
    %p83 = por %p81, %p82
    %p84 = scmp.ne.s32.totalorder %s72, %s73
    %p85 = scmp.eq.s32.totalorder %s21, 3
    %p86 = por %p84, %p85
    %p88 = scmp.ne.s32.totalorder %s73, %s87
    %p89 = scmp.eq.s32.totalorder %s21, 0
    %p90 = por %p88, %p89
    %s92 = sadd.s32 %s91, 1
    %p95 = scmp.eq.s32.totalorder %s15, 3
    %p96 = scmp.ne.s32.totalorder %s91, %s93
    %p97 = scmp.eq.s32.totalorder %s15, 0
    %p98 = por %p96, %p97
    %p99 = scmp.ne.s32.totalorder %s91, %s93
    %p100 = scmp.eq.s32.totalorder %s20, 3
    %p101 = por %p99, %p100
    %p102 = scmp.ne.s32.totalorder %s93, %s94
    %p103 = scmp.eq.s32.totalorder %s20, 0
    %p104 = por %p102, %p103
    %p105 = scmp.ne.s32.totalorder %s93, %s94
    %p106 = scmp.eq.s32.totalorder %s21, 3
    %p107 = por %p105, %p106
    %p109 = scmp.ne.s32.totalorder %s94, %s108
    %p110 = scmp.eq.s32.totalorder %s21, 0
    %p111 = por %p109, %p110
    %s113 = sadd.s32 %s112, 1
    %p116 = scmp.eq.s32.totalorder %s15, 3
    %p117 = scmp.ne.s32.totalorder %s112, %s114
    %p118 = scmp.eq.s32.totalorder %s15, 0
    %p119 = por %p117, %p118
    %p120 = scmp.ne.s32.totalorder %s112, %s114
    %p121 = scmp.eq.s32.totalorder %s20, 3
    %p122 = por %p120, %p121
    %p123 = scmp.ne.s32.totalorder %s114, %s115
    %p124 = scmp.eq.s32.totalorder %s20, 0
    %p125 = por %p123, %p124
    %p126 = scmp.ne.s32.totalorder %s114, %s115
    %p127 = scmp.eq.s32.totalorder %s21, 3
    %p128 = por %p126, %p127
    %p130 = scmp.ne.s32.totalorder %s115, %s129
    %p131 = scmp.eq.s32.totalorder %s21, 0
    %p132 = por %p130, %p131
    %s134 = sadd.s32 %s133, 1
    %p137 = scmp.eq.s32.totalorder %s15, 3
    %p138 = scmp.ne.s32.totalorder %s133, %s135
    %p139 = scmp.eq.s32.totalorder %s15, 0
    %p140 = por %p138, %p139
    %p141 = scmp.ne.s32.totalorder %s133, %s135
    %p142 = scmp.eq.s32.totalorder %s20, 3
    %p143 = por %p141, %p142
    %p144 = scmp.ne.s32.totalorder %s135, %s136
    %p145 = scmp.eq.s32.totalorder %s20, 0
    %p146 = por %p144, %p145
    %p147 = scmp.ne.s32.totalorder %s135, %s136
    %p148 = scmp.eq.s32.totalorder %s21, 3
    %p149 = por %p147, %p148
    %p151 = scmp.ne.s32.totalorder %s136, %s150
    %p152 = scmp.eq.s32.totalorder %s21, 0
    %p153 = por %p151, %p152
    %s155 = sadd.s32 %s154, 1
    %p158 = scmp.eq.s32.totalorder %s15, 3
    %p159 = scmp.ne.s32.totalorder %s154, %s156
    %p160 = scmp.eq.s32.totalorder %s15, 0
    %p161 = por %p159, %p160
    %p162 = scmp.ne.s32.totalorder %s154, %s156
    %p163 = scmp.eq.s32.totalorder %s20, 3
    %p164 = por %p162, %p163
    %p165 = scmp.ne.s32.totalorder %s156, %s157
    %p166 = scmp.eq.s32.totalorder %s20, 0
    %p167 = por %p165, %p166
    %p168 = scmp.ne.s32.totalorder %s156, %s157
    %p169 = scmp.eq.s32.totalorder %s21, 3
    %p170 = por %p168, %p169
    %p172 = scmp.ne.s32.totalorder %s157, %s171
    %p173 = scmp.eq.s32.totalorder %s21, 0
    %p174 = por %p172, %p173
    %s175 = ssub.s32 %s15, %s22
    %p176 = scmp.eq.s32.totalorder %s175, 0
    %s178 = sadd.s32 %s177, 1
    %s179 = scalar_select %p176, %s177, %s178
    %p182 = pneg %p176
    %p183 = scmp.eq.s32.totalorder %s15, 3
    %p184 = por %p182, %p183
    %p185 = scmp.ne.s32.totalorder %s177, %s180
    %p186 = scmp.eq.s32.totalorder %s15, 0
    %p187 = por %p185, %p186
    %p188 = scmp.ne.s32.totalorder %s177, %s180
    %p189 = scmp.eq.s32.totalorder %s20, 3
    %p190 = por %p188, %p189
    %p191 = scmp.ne.s32.totalorder %s180, %s181
    %p192 = scmp.eq.s32.totalorder %s20, 0
    %p193 = por %p191, %p192
    %p194 = scmp.ne.s32.totalorder %s180, %s181
    %p195 = scmp.eq.s32.totalorder %s21, 3
    %p196 = por %p194, %p195
    %p198 = scmp.ne.s32.totalorder %s181, %s197
    %p199 = scmp.eq.s32.totalorder %s21, 0
    %p200 = por %p198, %p199
    %p201 = scmp.le.s32.totalorder 1, %s15
    %p202 = scmp.lt.s32.totalorder %s15, 5
    %p203 = pnand %p201, %p202
    %p204 = pneg %p203
    // Predicated region
    $region9: #{tpu_custom_call.1} parent=5 // pred_check
      _
    $region10: #{tpu_custom_call.1} parent=5 // pred_check_branch
      %206 = sbr.rel (%p203) target = $region12
    $region11: #{tpu_custom_call.1} parent=5 // pred_region
      %s207 = ssub.s32 %s15, 1
      // Predicated region
      $region13: #{tpu_custom_call.1} parent=11 // pred_check
        %p208 = pneg %p62
      $region14: #{tpu_custom_call.1} parent=11 // pred_check_branch
        %210 = sbr.rel (%p208) target = $region16
      $region15: #{tpu_custom_call.1} parent=11 // pred_region
        _
      $region16: #{tpu_custom_call.1} parent=11 // pred_fallthru
        _
      // Predicated region
      $region17: #{tpu_custom_call.1} parent=11 // pred_check
        %p211 = pneg %p83
      $region18: #{tpu_custom_call.1} parent=11 // pred_check_branch
        %213 = sbr.rel (%p211) target = $region20
      $region19: #{tpu_custom_call.1} parent=11 // pred_region
        _
      $region20: #{tpu_custom_call.1} parent=11 // pred_fallthru
        _
      // Predicated region
      $region21: #{tpu_custom_call.1} parent=11 // pred_check
        %p214 = pneg %p104
      $region22: #{tpu_custom_call.1} parent=11 // pred_check_branch
        %216 = sbr.rel (%p214) target = $region24
      $region23: #{tpu_custom_call.1} parent=11 // pred_region
        _
      $region24: #{tpu_custom_call.1} parent=11 // pred_fallthru
        _
      // Predicated region
      $region25: #{tpu_custom_call.1} parent=11 // pred_check
        %p217 = pneg %p125
      $region26: #{tpu_custom_call.1} parent=11 // pred_check_branch
        %219 = sbr.rel (%p217) target = $region28
      $region27: #{tpu_custom_call.1} parent=11 // pred_region
        _
      $region28: #{tpu_custom_call.1} parent=11 // pred_fallthru
        _
      // Predicated region
      $region29: #{tpu_custom_call.1} parent=11 // pred_check
        %p220 = pneg %p146
      $region30: #{tpu_custom_call.1} parent=11 // pred_check_branch
        %222 = sbr.rel (%p220) target = $region32
      $region31: #{tpu_custom_call.1} parent=11 // pred_region
        _
      $region32: #{tpu_custom_call.1} parent=11 // pred_fallthru
        _
      // Predicated region
      $region33: #{tpu_custom_call.1} parent=11 // pred_check
        %p223 = pneg %p167
      $region34: #{tpu_custom_call.1} parent=11 // pred_check_branch
        %225 = sbr.rel (%p223) target = $region36
      $region35: #{tpu_custom_call.1} parent=11 // pred_region
        _
      $region36: #{tpu_custom_call.1} parent=11 // pred_fallthru
        _
    $region12: #{tpu_custom_call.1} parent=5 // pred_fallthru
      _
    %p226 = scmp.lt.s32.totalorder %s15, 4
    // Predicated region
    $region37: #{tpu_custom_call.1} parent=5 // pred_check
      %p227 = pneg %p226
    $region38: #{tpu_custom_call.1} parent=5 // pred_check_branch
      %229 = sbr.rel (%p227) target = $region40
    $region39: #{tpu_custom_call.1} parent=5 // pred_region
      // Predicated region
      $region41: #{tpu_custom_call.1} parent=39 // pred_check
        %p230 = pneg %p35
      $region42: #{tpu_custom_call.1} parent=39 // pred_check_branch
        %232 = sbr.rel (%p230) target = $region44
      $region43: #{tpu_custom_call.1} parent=39 // pred_region
        %s233 = smul.u32 32, %s15
        %p234 = scmp.lt.s32.totalorder %s233, 127
        %s235 = scalar_select %p234, %s233, 127
        %s236 = smul.addr %s235, 8
        %s237 = scalar_lea.vmem %s0, %s236
        %s238 = smul.u32 32, %s15
      $region44: #{tpu_custom_call.1} parent=39 // pred_fallthru
        _
    $region40: #{tpu_custom_call.1} parent=5 // pred_fallthru
      _
    %p239 = scmp.le.s32.totalorder 1, %s15
    %p240 = scmp.lt.s32.totalorder %s15, 5
    %p241 = pnand %p239, %p240
    %p242 = pneg %p241
    // Predicated region
    $region45: #{tpu_custom_call.1} parent=5 // pred_check
      _
    $region46: #{tpu_custom_call.1} parent=5 // pred_check_branch
      %244 = sbr.rel (%p241) target = $region48
    $region47: #{tpu_custom_call.1} parent=5 // pred_region
      %s245 = ssub.s32 %s15, 1
      %s246 = smul.u32 32, %s20
      %p247 = scmp.lt.s32.totalorder %s246, 127
      %s248 = scalar_select %p247, %s246, 127
      %s249 = smul.addr %s248, 8
      %s250 = scalar_lea.vmem %s0, %s249
      %p251 = pneg %p41
      %p252 = pneg %p38
      %p253 = pneg %p62
      %p254 = pneg %p59
      %p255 = pneg %p83
      %p256 = pneg %p80
      %p257 = pneg %p104
      %p258 = pneg %p101
      %p259 = pneg %p125
      %p260 = pneg %p122
      %p261 = pneg %p146
      %p262 = pneg %p143
      %p263 = pneg %p167
      %p264 = pneg %p164
      %p265 = pneg %p193
      %p266 = pneg %p190
      %s267 = smul.u32 32, %s20
      %p268 = scmp.lt.s32.totalorder %s267, 127
      %s269 = scalar_select %p268, %s267, 127
      %s270 = smul.addr %s269, 8
      %s271 = scalar_lea.vmem %s7, %s270
      %s272 = smul.u32 32, %s20
      %p273 = scmp.lt.s32.totalorder %s272, 127
      %s274 = scalar_select %p273, %s272, 127
      %s275 = smul.addr %s274, 8
      %s276 = scalar_lea.vmem %s0, %s275
      %s277 = smul.u32 32, %s20
      %s278 = smul.u32 32, %s20
      %p279 = scmp.lt.s32.totalorder %s278, 127
      %s280 = scalar_select %p279, %s278, 127
      %s281 = smul.addr %s280, 8
      %s282 = scalar_lea.vmem %s7, %s281
      %s283 = smul.u32 32, %s20
      %v285 = vld [vmem:[%s276] sm:$0xff]
      %v286 = vld [vmem:[%s276 + $0x8] sm:$0xff]
      %v287 = vld [vmem:[%s276 + $0x10] sm:$0xff]
      %v288 = vld [vmem:[%s276 + $0x18] sm:$0xff]
      %v289 = vld [vmem:[%s276 + $0x20] sm:$0xff]
      %v290 = vld [vmem:[%s276 + $0x28] sm:$0xff]
      %v291 = vld [vmem:[%s276 + $0x30] sm:$0xff]
      %v292 = vld [vmem:[%s276 + $0x38] sm:$0xff]
      %v293 = vld [vmem:[%s276 + $0x40] sm:$0xff]
      %v294 = vld [vmem:[%s276 + $0x48] sm:$0xff]
      %v295 = vld [vmem:[%s276 + $0x50] sm:$0xff]
      %v296 = vld [vmem:[%s276 + $0x58] sm:$0xff]
      %v297 = vld [vmem:[%s276 + $0x60] sm:$0xff]
      %v298 = vld [vmem:[%s276 + $0x68] sm:$0xff]
      %v299 = vld [vmem:[%s276 + $0x70] sm:$0xff]
      %v300 = vld [vmem:[%s276 + $0x78] sm:$0xff]
      %v301 = vld [vmem:[%s276 + $0x80] sm:$0xff]
      %v302 = vld [vmem:[%s276 + $0x88] sm:$0xff]
      %v303 = vld [vmem:[%s276 + $0x90] sm:$0xff]
      %v304 = vld [vmem:[%s276 + $0x98] sm:$0xff]
      %v305 = vld [vmem:[%s276 + $0xa0] sm:$0xff]
      %v306 = vld [vmem:[%s276 + $0xa8] sm:$0xff]
      %v307 = vld [vmem:[%s276 + $0xb0] sm:$0xff]
      %v308 = vld [vmem:[%s276 + $0xb8] sm:$0xff]
      %v309 = vld [vmem:[%s276 + $0xc0] sm:$0xff]
      %v310 = vld [vmem:[%s276 + $0xc8] sm:$0xff]
      %v311 = vld [vmem:[%s276 + $0xd0] sm:$0xff]
      %v312 = vld [vmem:[%s276 + $0xd8] sm:$0xff]
      %v313 = vld [vmem:[%s276 + $0xe0] sm:$0xff]
      %v314 = vld [vmem:[%s276 + $0xe8] sm:$0xff]
      %v315 = vld [vmem:[%s276 + $0xf0] sm:$0xff]
      %v316 = vld [vmem:[%s276 + $0xf8] sm:$0xff]
      %v317 = vpack.c.bf16 %v286, %v285
      %v318 = vpack.c.bf16 %v288, %v287
      %v319 = vpack.c.bf16 %v290, %v289
      %v320 = vpack.c.bf16 %v292, %v291
      %v321 = vpack.c.bf16 %v294, %v293
      %v322 = vpack.c.bf16 %v296, %v295
      %v323 = vpack.c.bf16 %v298, %v297
      %v324 = vpack.c.bf16 %v300, %v299
      %v325 = vpack.c.bf16 %v302, %v301
      %v326 = vpack.c.bf16 %v304, %v303
      %v327 = vpack.c.bf16 %v306, %v305
      %v328 = vpack.c.bf16 %v308, %v307
      %v329 = vpack.c.bf16 %v310, %v309
      %v330 = vpack.c.bf16 %v312, %v311
      %v331 = vpack.c.bf16 %v314, %v313
      %v332 = vpack.c.bf16 %v316, %v315
      %v333 = vld [vmem:[%s1] sm:$0xf]
      %v334 = vld [vmem:[%s1 + $0x4] sm:$0xf]
      %v335 = vld [vmem:[%s1 + $0x8] sm:$0xf]
      %v336 = vld [vmem:[%s1 + $0xc] sm:$0xf]
      %v337 = vld [vmem:[%s2] sm:$0x1]
      %v339 = vlaneseq
      %v340 = vshrl.u32 %v339, 7
      %v341 = vsub.s32 0, %v340
      %v342 = vrot.slane %v337, %v341
      %v348 = vunpack.c.l.b16 %v333
      %v349 = vunpack.c.l.b16 %v334
      %v350 = vunpack.c.l.b16 %v335
      %v351 = vunpack.c.l.b16 %v336
      %v352 = vpack.c.b16 %v349, %v348
      %v353 = vpack.c.b16 %v351, %v350
      %vm356 = vcmask 261120
      %v358 = vsel %vm356, %v317, 0
      %v361 = vsel %vm356, %v318, 0
      %v364 = vsel %vm356, %v319, 0
      %v367 = vsel %vm356, %v320, 0
      %v370 = vsel %vm356, %v321, 0
      %v373 = vsel %vm356, %v322, 0
      %v376 = vsel %vm356, %v323, 0
      %v379 = vsel %vm356, %v324, 0
      %v382 = vsel %vm356, %v325, 0
      %v385 = vsel %vm356, %v326, 0
      %v388 = vsel %vm356, %v327, 0
      %v391 = vsel %vm356, %v328, 0
      %v394 = vsel %vm356, %v329, 0
      %v397 = vsel %vm356, %v330, 0
      %v400 = vsel %vm356, %v331, 0
      %v403 = vsel %vm356, %v332, 0
      %405 = vmatprep.subr.bf16.mxu0 0
      %406 = vmatpush1.bf16.msra.mxu0 %v352
      %407 = vmatprep.subr.bf16.mxu0 0
      %408 = vmatpush1.bf16.msra.mxu0 %v353
      %409 = vmatprep.subr.bf16.mxu0 0
      %410 = vmatpush1.bf16.msra.mxu0 0
      %411 = vmatprep.subr.bf16.mxu0 0
      %412 = vmatpush1.bf16.msra.mxu0 0
      %413 = vmatprep.subr.bf16.mxu0 0
      %414 = vmatpush1.bf16.msra.mxu0 0
      %415 = vmatprep.subr.bf16.mxu0 0
      %416 = vmatpush1.bf16.msra.mxu0 0
      %417 = vmatprep.subr.bf16.mxu0 0
      %418 = vmatpush1.bf16.msra.mxu0 0
      %419 = vmatprep.subr.bf16.mxu0 0
      %420 = vmatpush1.bf16.msra.mxu0 0
      %421 = vmatprep.subr.bf16.mxu0 0
      %422 = vmatpush1.bf16.msra.mxu0 0
      %423 = vmatprep.subr.bf16.mxu0 0
      %424 = vmatpush1.bf16.msra.mxu0 0
      %425 = vmatprep.subr.bf16.mxu0 0
      %426 = vmatpush1.bf16.msra.mxu0 0
      %427 = vmatprep.subr.bf16.mxu0 0
      %428 = vmatpush1.bf16.msra.mxu0 0
      %429 = vmatprep.subr.bf16.mxu0 0
      %430 = vmatpush1.bf16.msra.mxu0 0
      %431 = vmatprep.subr.bf16.mxu0 0
      %432 = vmatpush1.bf16.msra.mxu0 0
      %433 = vmatprep.subr.bf16.mxu0 0
      %434 = vmatpush1.bf16.msra.mxu0 0
      %435 = vmatprep.subr.bf16.mxu0 0
      %436 = vmatpush1.bf16.msra.mxu0 0
      %437 = vmatprep.mubr.bf16.mxu0 0
      %438 = vmatmul.mubr.bf16.gmra.mrb[0].mxu0 %v358
      %v439 = vpop.f32.mrb[0].mxu0
      %v440 = vadd.f32 %v342, %v439
      %v441 = vpop.f32.mrb[0].mxu0
      %v442 = vpop.f32.mrb[0].mxu0
      %v443 = vadd.f32 %v342, %v442
      %v444 = vpop.f32.mrb[0].mxu0
      %445 = vmatprep.mubr.bf16.mxu0 0
      %446 = vmatmul.mubr.bf16.gmra.mrb[0].mxu0 %v361
      %v447 = vpop.f32.mrb[0].mxu0
      %v448 = vadd.f32 %v342, %v447
      %v449 = vpop.f32.mrb[0].mxu0
      %v450 = vpop.f32.mrb[0].mxu0
      %v451 = vadd.f32 %v342, %v450
      %v452 = vpop.f32.mrb[0].mxu0
      %453 = vmatprep.mubr.bf16.mxu0 0
      %454 = vmatmul.mubr.bf16.gmra.mrb[0].mxu0 %v364
      %v455 = vpop.f32.mrb[0].mxu0
      %v456 = vadd.f32 %v342, %v455
      %v457 = vpop.f32.mrb[0].mxu0
      %v458 = vpop.f32.mrb[0].mxu0
      %v459 = vadd.f32 %v342, %v458
      %v460 = vpop.f32.mrb[0].mxu0
      %461 = vmatprep.mubr.bf16.mxu0 0
      %462 = vmatmul.mubr.bf16.gmra.mrb[0].mxu0 %v367
      %v463 = vpop.f32.mrb[0].mxu0
      %v464 = vadd.f32 %v342, %v463
      %v465 = vpop.f32.mrb[0].mxu0
      %v466 = vpop.f32.mrb[0].mxu0
      %v467 = vadd.f32 %v342, %v466
      %v468 = vpop.f32.mrb[0].mxu0
      %469 = vmatprep.mubr.bf16.mxu0 0
      %470 = vmatmul.mubr.bf16.gmra.mrb[0].mxu0 %v370
      %v471 = vpop.f32.mrb[0].mxu0
      %v472 = vadd.f32 %v342, %v471
      %v473 = vpop.f32.mrb[0].mxu0
      %v474 = vpop.f32.mrb[0].mxu0
      %v475 = vadd.f32 %v342, %v474
      %v476 = vpop.f32.mrb[0].mxu0
      %477 = vmatprep.mubr.bf16.mxu0 0
      %478 = vmatmul.mubr.bf16.gmra.mrb[0].mxu0 %v373
      %v479 = vpop.f32.mrb[0].mxu0
      %v480 = vadd.f32 %v342, %v479
      %v481 = vpop.f32.mrb[0].mxu0
      %v482 = vpop.f32.mrb[0].mxu0
      %v483 = vadd.f32 %v342, %v482
      %v484 = vpop.f32.mrb[0].mxu0
      %485 = vmatprep.mubr.bf16.mxu0 0
      %486 = vmatmul.mubr.bf16.gmra.mrb[0].mxu0 %v376
      %v487 = vpop.f32.mrb[0].mxu0
      %v488 = vadd.f32 %v342, %v487
      %v489 = vpop.f32.mrb[0].mxu0
      %v490 = vpop.f32.mrb[0].mxu0
      %v491 = vadd.f32 %v342, %v490
      %v492 = vpop.f32.mrb[0].mxu0
      %493 = vmatprep.mubr.bf16.mxu0 0
      %494 = vmatmul.mubr.bf16.gmra.mrb[0].mxu0 %v379
      %v495 = vpop.f32.mrb[0].mxu0
      %v496 = vadd.f32 %v342, %v495
      %v497 = vpop.f32.mrb[0].mxu0
      %v498 = vpop.f32.mrb[0].mxu0
      %v499 = vadd.f32 %v342, %v498
      %v500 = vpop.f32.mrb[0].mxu0
      %501 = vmatprep.mubr.bf16.mxu0 0
      %502 = vmatmul.mubr.bf16.gmra.mrb[0].mxu0 %v382
      %v503 = vpop.f32.mrb[0].mxu0
      %v504 = vadd.f32 %v342, %v503
      %v505 = vpop.f32.mrb[0].mxu0
      %v506 = vpop.f32.mrb[0].mxu0
      %v507 = vadd.f32 %v342, %v506
      %v508 = vpop.f32.mrb[0].mxu0
      %509 = vmatprep.mubr.bf16.mxu0 0
      %510 = vmatmul.mubr.bf16.gmra.mrb[0].mxu0 %v385
      %v511 = vpop.f32.mrb[0].mxu0
      %v512 = vadd.f32 %v342, %v511
      %v513 = vpop.f32.mrb[0].mxu0
      %v514 = vpop.f32.mrb[0].mxu0
      %v515 = vadd.f32 %v342, %v514
      %v516 = vpop.f32.mrb[0].mxu0
      %517 = vmatprep.mubr.bf16.mxu0 0
      %518 = vmatmul.mubr.bf16.gmra.mrb[0].mxu0 %v388
      %v519 = vpop.f32.mrb[0].mxu0
      %v520 = vadd.f32 %v342, %v519
      %v521 = vpop.f32.mrb[0].mxu0
      %v522 = vpop.f32.mrb[0].mxu0
      %v523 = vadd.f32 %v342, %v522
      %v524 = vpop.f32.mrb[0].mxu0
      %525 = vmatprep.mubr.bf16.mxu0 0
      %526 = vmatmul.mubr.bf16.gmra.mrb[0].mxu0 %v391
      %v527 = vpop.f32.mrb[0].mxu0
      %v528 = vadd.f32 %v342, %v527
      %v529 = vpop.f32.mrb[0].mxu0
      %v530 = vpop.f32.mrb[0].mxu0
      %v531 = vadd.f32 %v342, %v530
      %v532 = vpop.f32.mrb[0].mxu0
      %533 = vmatprep.mubr.bf16.mxu0 0
      %534 = vmatmul.mubr.bf16.gmra.mrb[0].mxu0 %v394
      %v535 = vpop.f32.mrb[0].mxu0
      %v536 = vadd.f32 %v342, %v535
      %v537 = vpop.f32.mrb[0].mxu0
      %v538 = vpop.f32.mrb[0].mxu0
      %v539 = vadd.f32 %v342, %v538
      %v540 = vpop.f32.mrb[0].mxu0
      %541 = vmatprep.mubr.bf16.mxu0 0
      %542 = vmatmul.mubr.bf16.gmra.mrb[0].mxu0 %v397
      %v543 = vpop.f32.mrb[0].mxu0
      %v544 = vadd.f32 %v342, %v543
      %v545 = vpop.f32.mrb[0].mxu0
      %v546 = vpop.f32.mrb[0].mxu0
      %v547 = vadd.f32 %v342, %v546
      %v548 = vpop.f32.mrb[0].mxu0
      %549 = vmatprep.mubr.bf16.mxu0 0
      %550 = vmatmul.mubr.bf16.gmra.mrb[0].mxu0 %v400
      %v551 = vpop.f32.mrb[0].mxu0
      %v552 = vadd.f32 %v342, %v551
      %v553 = vpop.f32.mrb[0].mxu0
      %v554 = vpop.f32.mrb[0].mxu0
      %v555 = vadd.f32 %v342, %v554
      %v556 = vpop.f32.mrb[0].mxu0
      %557 = vmatprep.mubr.bf16.mxu0 0
      %558 = vmatmul.mubr.bf16.gmra.mrb[0].mxu0 %v403
      %v559 = vpop.f32.mrb[0].mxu0
      %v560 = vadd.f32 %v342, %v559
      %v561 = vpop.f32.mrb[0].mxu0
      %v562 = vpop.f32.mrb[0].mxu0
      %v563 = vadd.f32 %v342, %v562
      %v564 = vpop.f32.mrb[0].mxu0
      %565 = vdwg.mxu0
      %v566 = vmax.f32 %v440, 0.0
      %v567 = vmax.f32 %v443, 0.0
      %v568 = vmax.f32 %v448, 0.0
      %v569 = vmax.f32 %v451, 0.0
      %v570 = vmax.f32 %v456, 0.0
      %v571 = vmax.f32 %v459, 0.0
      %v572 = vmax.f32 %v464, 0.0
      %v573 = vmax.f32 %v467, 0.0
      %v574 = vmax.f32 %v472, 0.0
      %v575 = vmax.f32 %v475, 0.0
      %v576 = vmax.f32 %v480, 0.0
      %v577 = vmax.f32 %v483, 0.0
      %v578 = vmax.f32 %v488, 0.0
      %v579 = vmax.f32 %v491, 0.0
      %v580 = vmax.f32 %v496, 0.0
      %v581 = vmax.f32 %v499, 0.0
      %v582 = vmax.f32 %v504, 0.0
      %v583 = vmax.f32 %v507, 0.0
      %v584 = vmax.f32 %v512, 0.0
      %v585 = vmax.f32 %v515, 0.0
      %v586 = vmax.f32 %v520, 0.0
      %v587 = vmax.f32 %v523, 0.0
      %v588 = vmax.f32 %v528, 0.0
      %v589 = vmax.f32 %v531, 0.0
      %v590 = vmax.f32 %v536, 0.0
      %v591 = vmax.f32 %v539, 0.0
      %v592 = vmax.f32 %v544, 0.0
      %v593 = vmax.f32 %v547, 0.0
      %v594 = vmax.f32 %v552, 0.0
      %v595 = vmax.f32 %v555, 0.0
      %v596 = vmax.f32 %v560, 0.0
      %v597 = vmax.f32 %v563, 0.0
      %v598 = vpack.c.bf16 %v567, %v566
      %v599 = vpack.c.bf16 %v569, %v568
      %v600 = vpack.c.bf16 %v571, %v570
      %v601 = vpack.c.bf16 %v573, %v572
      %v602 = vpack.c.bf16 %v575, %v574
      %v603 = vpack.c.bf16 %v577, %v576
      %v604 = vpack.c.bf16 %v579, %v578
      %v605 = vpack.c.bf16 %v581, %v580
      %v606 = vpack.c.bf16 %v583, %v582
      %v607 = vpack.c.bf16 %v585, %v584
      %v608 = vpack.c.bf16 %v587, %v586
      %v609 = vpack.c.bf16 %v589, %v588
      %v610 = vpack.c.bf16 %v591, %v590
      %v611 = vpack.c.bf16 %v593, %v592
      %v612 = vpack.c.bf16 %v595, %v594
      %v613 = vpack.c.bf16 %v597, %v596
      %v614 = vld [vmem:[%s3] sm:$0xf]
      %v615 = vld [vmem:[%s3 + $0x4] sm:$0xf]
      %v616 = vld [vmem:[%s3 + $0x8] sm:$0xf]
      %v617 = vld [vmem:[%s3 + $0xc] sm:$0xf]
      %v618 = vld [vmem:[%s3 + $0x10] sm:$0xf]
      %v619 = vld [vmem:[%s3 + $0x14] sm:$0xf]
      %v620 = vld [vmem:[%s3 + $0x18] sm:$0xf]
      %v621 = vld [vmem:[%s3 + $0x1c] sm:$0xf]
      %v622 = vld [vmem:[%s3 + $0x20] sm:$0xf]
      %v623 = vld [vmem:[%s3 + $0x24] sm:$0xf]
      %v624 = vld [vmem:[%s3 + $0x28] sm:$0xf]
      %v625 = vld [vmem:[%s3 + $0x2c] sm:$0xf]
      %v626 = vld [vmem:[%s3 + $0x30] sm:$0xf]
      %v627 = vld [vmem:[%s3 + $0x34] sm:$0xf]
      %v628 = vld [vmem:[%s3 + $0x38] sm:$0xf]
      %v629 = vld [vmem:[%s3 + $0x3c] sm:$0xf]
      %v630 = vld [vmem:[%s4] sm:$0x1]
      %v632 = vlaneseq
      %v633 = vshrl.u32 %v632, 7
      %v634 = vsub.s32 0, %v633
      %v635 = vrot.slane %v630, %v634
      %v653 = vunpack.c.l.b16 %v614
      %v654 = vunpack.c.l.b16 %v615
      %v655 = vunpack.c.l.b16 %v616
      %v656 = vunpack.c.l.b16 %v617
      %v657 = vunpack.c.l.b16 %v618
      %v658 = vunpack.c.l.b16 %v619
      %v659 = vunpack.c.l.b16 %v620
      %v660 = vunpack.c.l.b16 %v621
      %v661 = vunpack.c.l.b16 %v622
      %v662 = vunpack.c.l.b16 %v623
      %v663 = vunpack.c.l.b16 %v624
      %v664 = vunpack.c.l.b16 %v625
      %v665 = vunpack.c.l.b16 %v626
      %v666 = vunpack.c.l.b16 %v627
      %v667 = vunpack.c.l.b16 %v628
      %v668 = vunpack.c.l.b16 %v629
      %v669 = vpack.c.b16 %v654, %v653
      %v670 = vpack.c.b16 %v656, %v655
      %v671 = vpack.c.b16 %v658, %v657
      %v672 = vpack.c.b16 %v660, %v659
      %v673 = vpack.c.b16 %v662, %v661
      %v674 = vpack.c.b16 %v664, %v663
      %v675 = vpack.c.b16 %v666, %v665
      %v676 = vpack.c.b16 %v668, %v667
      %685 = vmatprep.subr.bf16.mxu0 0
      %686 = vmatpush1.bf16.msra.mxu0 %v669
      %687 = vmatprep.subr.bf16.mxu0 0
      %688 = vmatpush1.bf16.msra.mxu0 %v670
      %689 = vmatprep.subr.bf16.mxu0 0
      %690 = vmatpush1.bf16.msra.mxu0 %v671
      %691 = vmatprep.subr.bf16.mxu0 0
      %692 = vmatpush1.bf16.msra.mxu0 %v672
      %693 = vmatprep.subr.bf16.mxu0 0
      %694 = vmatpush1.bf16.msra.mxu0 %v673
      %695 = vmatprep.subr.bf16.mxu0 0
      %696 = vmatpush1.bf16.msra.mxu0 %v674
      %697 = vmatprep.subr.bf16.mxu0 0
      %698 = vmatpush1.bf16.msra.mxu0 %v675
      %699 = vmatprep.subr.bf16.mxu0 0
      %700 = vmatpush1.bf16.msra.mxu0 %v676
      %701 = vmatprep.subr.bf16.mxu0 0
      %702 = vmatpush1.bf16.msra.mxu0 0
      %703 = vmatprep.subr.bf16.mxu0 0
      %704 = vmatpush1.bf16.msra.mxu0 0
      %705 = vmatprep.subr.bf16.mxu0 0
      %706 = vmatpush1.bf16.msra.mxu0 0
      %707 = vmatprep.subr.bf16.mxu0 0
      %708 = vmatpush1.bf16.msra.mxu0 0
      %709 = vmatprep.subr.bf16.mxu0 0
      %710 = vmatpush1.bf16.msra.mxu0 0
      %711 = vmatprep.subr.bf16.mxu0 0
      %712 = vmatpush1.bf16.msra.mxu0 0
      %713 = vmatprep.subr.bf16.mxu0 0
      %714 = vmatpush1.bf16.msra.mxu0 0
      %715 = vmatprep.subr.bf16.mxu0 0
      %716 = vmatpush1.bf16.msra.mxu0 0
      %717 = vmatprep.mubr.bf16.mxu0 0
      %718 = vmatmul.mubr.bf16.gmra.mrb[0].mxu0 %v598
      %v719 = vpop.f32.mrb[0].mxu0
      %v720 = vadd.f32 %v635, %v719
      %v721 = vpop.f32.mrb[0].mxu0
      %v722 = vpop.f32.mrb[0].mxu0
      %v723 = vadd.f32 %v635, %v722
      %v724 = vpop.f32.mrb[0].mxu0
      %725 = vmatprep.mubr.bf16.mxu0 0
      %726 = vmatmul.mubr.bf16.gmra.mrb[0].mxu0 %v599
      %v727 = vpop.f32.mrb[0].mxu0
      %v728 = vadd.f32 %v635, %v727
      %v729 = vpop.f32.mrb[0].mxu0
      %v730 = vpop.f32.mrb[0].mxu0
      %v731 = vadd.f32 %v635, %v730
      %v732 = vpop.f32.mrb[0].mxu0
      %733 = vmatprep.mubr.bf16.mxu0 0
      %734 = vmatmul.mubr.bf16.gmra.mrb[0].mxu0 %v600
      %v735 = vpop.f32.mrb[0].mxu0
      %v736 = vadd.f32 %v635, %v735
      %v737 = vpop.f32.mrb[0].mxu0
      %v738 = vpop.f32.mrb[0].mxu0
      %v739 = vadd.f32 %v635, %v738
      %v740 = vpop.f32.mrb[0].mxu0
      %741 = vmatprep.mubr.bf16.mxu0 0
      %742 = vmatmul.mubr.bf16.gmra.mrb[0].mxu0 %v601
      %v743 = vpop.f32.mrb[0].mxu0
      %v744 = vadd.f32 %v635, %v743
      %v745 = vpop.f32.mrb[0].mxu0
      %v746 = vpop.f32.mrb[0].mxu0
      %v747 = vadd.f32 %v635, %v746
      %v748 = vpop.f32.mrb[0].mxu0
      %749 = vmatprep.mubr.bf16.mxu0 0
      %750 = vmatmul.mubr.bf16.gmra.mrb[0].mxu0 %v602
      %v751 = vpop.f32.mrb[0].mxu0
      %v752 = vadd.f32 %v635, %v751
      %v753 = vpop.f32.mrb[0].mxu0
      %v754 = vpop.f32.mrb[0].mxu0
      %v755 = vadd.f32 %v635, %v754
      %v756 = vpop.f32.mrb[0].mxu0
      %757 = vmatprep.mubr.bf16.mxu0 0
      %758 = vmatmul.mubr.bf16.gmra.mrb[0].mxu0 %v603
      %v759 = vpop.f32.mrb[0].mxu0
      %v760 = vadd.f32 %v635, %v759
      %v761 = vpop.f32.mrb[0].mxu0
      %v762 = vpop.f32.mrb[0].mxu0
      %v763 = vadd.f32 %v635, %v762
      %v764 = vpop.f32.mrb[0].mxu0
      %765 = vmatprep.mubr.bf16.mxu0 0
      %766 = vmatmul.mubr.bf16.gmra.mrb[0].mxu0 %v604
      %v767 = vpop.f32.mrb[0].mxu0
      %v768 = vadd.f32 %v635, %v767
      %v769 = vpop.f32.mrb[0].mxu0
      %v770 = vpop.f32.mrb[0].mxu0
      %v771 = vadd.f32 %v635, %v770
      %v772 = vpop.f32.mrb[0].mxu0
      %773 = vmatprep.mubr.bf16.mxu0 0
      %774 = vmatmul.mubr.bf16.gmra.mrb[0].mxu0 %v605
      %v775 = vpop.f32.mrb[0].mxu0
      %v776 = vadd.f32 %v635, %v775
      %v777 = vpop.f32.mrb[0].mxu0
      %v778 = vpop.f32.mrb[0].mxu0
      %v779 = vadd.f32 %v635, %v778
      %v780 = vpop.f32.mrb[0].mxu0
      %781 = vmatprep.mubr.bf16.mxu0 0
      %782 = vmatmul.mubr.bf16.gmra.mrb[0].mxu0 %v606
      %v783 = vpop.f32.mrb[0].mxu0
      %v784 = vadd.f32 %v635, %v783
      %v785 = vpop.f32.mrb[0].mxu0
      %v786 = vpop.f32.mrb[0].mxu0
      %v787 = vadd.f32 %v635, %v786
      %v788 = vpop.f32.mrb[0].mxu0
      %789 = vmatprep.mubr.bf16.mxu0 0
      %790 = vmatmul.mubr.bf16.gmra.mrb[0].mxu0 %v607
      %v791 = vpop.f32.mrb[0].mxu0
      %v792 = vadd.f32 %v635, %v791
      %v793 = vpop.f32.mrb[0].mxu0
      %v794 = vpop.f32.mrb[0].mxu0
      %v795 = vadd.f32 %v635, %v794
      %v796 = vpop.f32.mrb[0].mxu0
      %797 = vmatprep.mubr.bf16.mxu0 0
      %798 = vmatmul.mubr.bf16.gmra.mrb[0].mxu0 %v608
      %v799 = vpop.f32.mrb[0].mxu0
      %v800 = vadd.f32 %v635, %v799
      %v801 = vpop.f32.mrb[0].mxu0
      %v802 = vpop.f32.mrb[0].mxu0
      %v803 = vadd.f32 %v635, %v802
      %v804 = vpop.f32.mrb[0].mxu0
      %805 = vmatprep.mubr.bf16.mxu0 0
      %806 = vmatmul.mubr.bf16.gmra.mrb[0].mxu0 %v609
      %v807 = vpop.f32.mrb[0].mxu0
      %v808 = vadd.f32 %v635, %v807
      %v809 = vpop.f32.mrb[0].mxu0
      %v810 = vpop.f32.mrb[0].mxu0
      %v811 = vadd.f32 %v635, %v810
      %v812 = vpop.f32.mrb[0].mxu0
      %813 = vmatprep.mubr.bf16.mxu0 0
      %814 = vmatmul.mubr.bf16.gmra.mrb[0].mxu0 %v610
      %v815 = vpop.f32.mrb[0].mxu0
      %v816 = vadd.f32 %v635, %v815
      %v817 = vpop.f32.mrb[0].mxu0
      %v818 = vpop.f32.mrb[0].mxu0
      %v819 = vadd.f32 %v635, %v818
      %v820 = vpop.f32.mrb[0].mxu0
      %821 = vmatprep.mubr.bf16.mxu0 0
      %822 = vmatmul.mubr.bf16.gmra.mrb[0].mxu0 %v611
      %v823 = vpop.f32.mrb[0].mxu0
      %v824 = vadd.f32 %v635, %v823
      %v825 = vpop.f32.mrb[0].mxu0
      %v826 = vpop.f32.mrb[0].mxu0
      %v827 = vadd.f32 %v635, %v826
      %v828 = vpop.f32.mrb[0].mxu0
      %829 = vmatprep.mubr.bf16.mxu0 0
      %830 = vmatmul.mubr.bf16.gmra.mrb[0].mxu0 %v612
      %v831 = vpop.f32.mrb[0].mxu0
      %v832 = vadd.f32 %v635, %v831
      %v833 = vpop.f32.mrb[0].mxu0
      %v834 = vpop.f32.mrb[0].mxu0
      %v835 = vadd.f32 %v635, %v834
      %v836 = vpop.f32.mrb[0].mxu0
      %837 = vmatprep.mubr.bf16.mxu0 0
      %838 = vmatmul.mubr.bf16.gmra.mrb[0].mxu0 %v613
      %v839 = vpop.f32.mrb[0].mxu0
      %v840 = vadd.f32 %v635, %v839
      %v841 = vpop.f32.mrb[0].mxu0
      %v842 = vpop.f32.mrb[0].mxu0
      %v843 = vadd.f32 %v635, %v842
      %v844 = vpop.f32.mrb[0].mxu0
      %845 = vdwg.mxu0
      %v846 = vmax.f32 %v720, 0.0
      %v847 = vmax.f32 %v723, 0.0
      %v848 = vmax.f32 %v728, 0.0
      %v849 = vmax.f32 %v731, 0.0
      %v850 = vmax.f32 %v736, 0.0
      %v851 = vmax.f32 %v739, 0.0
      %v852 = vmax.f32 %v744, 0.0
      %v853 = vmax.f32 %v747, 0.0
      %v854 = vmax.f32 %v752, 0.0
      %v855 = vmax.f32 %v755, 0.0
      %v856 = vmax.f32 %v760, 0.0
      %v857 = vmax.f32 %v763, 0.0
      %v858 = vmax.f32 %v768, 0.0
      %v859 = vmax.f32 %v771, 0.0
      %v860 = vmax.f32 %v776, 0.0
      %v861 = vmax.f32 %v779, 0.0
      %v862 = vmax.f32 %v784, 0.0
      %v863 = vmax.f32 %v787, 0.0
      %v864 = vmax.f32 %v792, 0.0
      %v865 = vmax.f32 %v795, 0.0
      %v866 = vmax.f32 %v800, 0.0
      %v867 = vmax.f32 %v803, 0.0
      %v868 = vmax.f32 %v808, 0.0
      %v869 = vmax.f32 %v811, 0.0
      %v870 = vmax.f32 %v816, 0.0
      %v871 = vmax.f32 %v819, 0.0
      %v872 = vmax.f32 %v824, 0.0
      %v873 = vmax.f32 %v827, 0.0
      %v874 = vmax.f32 %v832, 0.0
      %v875 = vmax.f32 %v835, 0.0
      %v876 = vmax.f32 %v840, 0.0
      %v877 = vmax.f32 %v843, 0.0
      %v878 = vld [vmem:[%s5] sm:$0x1]
      %v880 = vlaneseq
      %v881 = vshrl.u32 %v880, 7
      %v882 = vsub.s32 0, %v881
      %v883 = vrot.slane %v878, %v882
      %v885 = vmul.f32 %v846, %v883
      %v886 = vmul.f32 %v847, %v883
      %v887 = vmul.f32 %v848, %v883
      %v888 = vmul.f32 %v849, %v883
      %v889 = vmul.f32 %v850, %v883
      %v890 = vmul.f32 %v851, %v883
      %v891 = vmul.f32 %v852, %v883
      %v892 = vmul.f32 %v853, %v883
      %v893 = vmul.f32 %v854, %v883
      %v894 = vmul.f32 %v855, %v883
      %v895 = vmul.f32 %v856, %v883
      %v896 = vmul.f32 %v857, %v883
      %v897 = vmul.f32 %v858, %v883
      %v898 = vmul.f32 %v859, %v883
      %v899 = vmul.f32 %v860, %v883
      %v900 = vmul.f32 %v861, %v883
      %v901 = vmul.f32 %v862, %v883
      %v902 = vmul.f32 %v863, %v883
      %v903 = vmul.f32 %v864, %v883
      %v904 = vmul.f32 %v865, %v883
      %v905 = vmul.f32 %v866, %v883
      %v906 = vmul.f32 %v867, %v883
      %v907 = vmul.f32 %v868, %v883
      %v908 = vmul.f32 %v869, %v883
      %v909 = vmul.f32 %v870, %v883
      %v910 = vmul.f32 %v871, %v883
      %v911 = vmul.f32 %v872, %v883
      %v912 = vmul.f32 %v873, %v883
      %v913 = vmul.f32 %v874, %v883
      %v914 = vmul.f32 %v875, %v883
      %v915 = vmul.f32 %v876, %v883
      %v916 = vmul.f32 %v877, %v883
      %917 = vadd.xlane.f32.xlu0 %v885
      %v918 = vpop.xlane.xlu0 %917
      %919 = vadd.xlane.f32.xlu0 %v886
      %v920 = vpop.xlane.xlu0 %919
      %921 = vadd.xlane.f32.xlu0 %v887
      %v922 = vpop.xlane.xlu0 %921
      %923 = vadd.xlane.f32.xlu0 %v888
      %v924 = vpop.xlane.xlu0 %923
      %925 = vadd.xlane.f32.xlu0 %v889
      %v926 = vpop.xlane.xlu0 %925
      %927 = vadd.xlane.f32.xlu0 %v890
      %v928 = vpop.xlane.xlu0 %927
      %929 = vadd.xlane.f32.xlu0 %v891
      %v930 = vpop.xlane.xlu0 %929
      %931 = vadd.xlane.f32.xlu0 %v892
      %v932 = vpop.xlane.xlu0 %931
      %933 = vadd.xlane.f32.xlu0 %v893
      %v934 = vpop.xlane.xlu0 %933
      %935 = vadd.xlane.f32.xlu0 %v894
      %v936 = vpop.xlane.xlu0 %935
      %937 = vadd.xlane.f32.xlu0 %v895
      %v938 = vpop.xlane.xlu0 %937
      %939 = vadd.xlane.f32.xlu0 %v896
      %v940 = vpop.xlane.xlu0 %939
      %941 = vadd.xlane.f32.xlu0 %v897
      %v942 = vpop.xlane.xlu0 %941
      %943 = vadd.xlane.f32.xlu0 %v898
      %v944 = vpop.xlane.xlu0 %943
      %945 = vadd.xlane.f32.xlu0 %v899
      %v946 = vpop.xlane.xlu0 %945
      %947 = vadd.xlane.f32.xlu0 %v900
      %v948 = vpop.xlane.xlu0 %947
      %949 = vadd.xlane.f32.xlu0 %v901
      %v950 = vpop.xlane.xlu0 %949
      %951 = vadd.xlane.f32.xlu0 %v902
      %v952 = vpop.xlane.xlu0 %951
      %953 = vadd.xlane.f32.xlu0 %v903
      %v954 = vpop.xlane.xlu0 %953
      %955 = vadd.xlane.f32.xlu0 %v904
      %v956 = vpop.xlane.xlu0 %955
      %957 = vadd.xlane.f32.xlu0 %v905
      %v958 = vpop.xlane.xlu0 %957
      %959 = vadd.xlane.f32.xlu0 %v906
      %v960 = vpop.xlane.xlu0 %959
      %961 = vadd.xlane.f32.xlu0 %v907
      %v962 = vpop.xlane.xlu0 %961
      %963 = vadd.xlane.f32.xlu0 %v908
      %v964 = vpop.xlane.xlu0 %963
      %965 = vadd.xlane.f32.xlu0 %v909
      %v966 = vpop.xlane.xlu0 %965
      %967 = vadd.xlane.f32.xlu0 %v910
      %v968 = vpop.xlane.xlu0 %967
      %969 = vadd.xlane.f32.xlu0 %v911
      %v970 = vpop.xlane.xlu0 %969
      %971 = vadd.xlane.f32.xlu0 %v912
      %v972 = vpop.xlane.xlu0 %971
      %973 = vadd.xlane.f32.xlu0 %v913
      %v974 = vpop.xlane.xlu0 %973
      %975 = vadd.xlane.f32.xlu0 %v914
      %v976 = vpop.xlane.xlu0 %975
      %977 = vadd.xlane.f32.xlu0 %v915
      %v978 = vpop.xlane.xlu0 %977
      %979 = vadd.xlane.f32.xlu0 %v916
      %v980 = vpop.xlane.xlu0 %979
      %v981 = vld [vmem:[#allocation2] sm:$0x1]
      %v983 = vlaneseq
      %v984 = vshrl.u32 %v983, 7
      %v985 = vsub.s32 0, %v984
      %v986 = vrot.slane %v981, %v985
      %v988 = vadd.f32 %v918, %v986
      %v989 = vadd.f32 %v920, %v986
      %v990 = vadd.f32 %v922, %v986
      %v991 = vadd.f32 %v924, %v986
      %v992 = vadd.f32 %v926, %v986
      %v993 = vadd.f32 %v928, %v986
      %v994 = vadd.f32 %v930, %v986
      %v995 = vadd.f32 %v932, %v986
      %v996 = vadd.f32 %v934, %v986
      %v997 = vadd.f32 %v936, %v986
      %v998 = vadd.f32 %v938, %v986
      %v999 = vadd.f32 %v940, %v986
      %v1000 = vadd.f32 %v942, %v986
      %v1001 = vadd.f32 %v944, %v986
      %v1002 = vadd.f32 %v946, %v986
      %v1003 = vadd.f32 %v948, %v986
      %v1004 = vadd.f32 %v950, %v986
      %v1005 = vadd.f32 %v952, %v986
      %v1006 = vadd.f32 %v954, %v986
      %v1007 = vadd.f32 %v956, %v986
      %v1008 = vadd.f32 %v958, %v986
      %v1009 = vadd.f32 %v960, %v986
      %v1010 = vadd.f32 %v962, %v986
      %v1011 = vadd.f32 %v964, %v986
      %v1012 = vadd.f32 %v966, %v986
      %v1013 = vadd.f32 %v968, %v986
      %v1014 = vadd.f32 %v970, %v986
      %v1015 = vadd.f32 %v972, %v986
      %v1016 = vadd.f32 %v974, %v986
      %v1017 = vadd.f32 %v976, %v986
      %v1018 = vadd.f32 %v978, %v986
      %v1019 = vadd.f32 %v980, %v986
      %v1020 = vsub.f32 0.0, %v988
      %v1021 = vsub.f32 0.0, %v989
      %v1022 = vsub.f32 0.0, %v990
      %v1023 = vsub.f32 0.0, %v991
      %v1024 = vsub.f32 0.0, %v992
      %v1025 = vsub.f32 0.0, %v993
      %v1026 = vsub.f32 0.0, %v994
      %v1027 = vsub.f32 0.0, %v995
      %v1028 = vsub.f32 0.0, %v996
      %v1029 = vsub.f32 0.0, %v997
      %v1030 = vsub.f32 0.0, %v998
      %v1031 = vsub.f32 0.0, %v999
      %v1032 = vsub.f32 0.0, %v1000
      %v1033 = vsub.f32 0.0, %v1001
      %v1034 = vsub.f32 0.0, %v1002
      %v1035 = vsub.f32 0.0, %v1003
      %v1036 = vsub.f32 0.0, %v1004
      %v1037 = vsub.f32 0.0, %v1005
      %v1038 = vsub.f32 0.0, %v1006
      %v1039 = vsub.f32 0.0, %v1007
      %v1040 = vsub.f32 0.0, %v1008
      %v1041 = vsub.f32 0.0, %v1009
      %v1042 = vsub.f32 0.0, %v1010
      %v1043 = vsub.f32 0.0, %v1011
      %v1044 = vsub.f32 0.0, %v1012
      %v1045 = vsub.f32 0.0, %v1013
      %v1046 = vsub.f32 0.0, %v1014
      %v1047 = vsub.f32 0.0, %v1015
      %v1048 = vsub.f32 0.0, %v1016
      %v1049 = vsub.f32 0.0, %v1017
      %v1050 = vsub.f32 0.0, %v1018
      %v1051 = vsub.f32 0.0, %v1019
      %v1052 = vmul.f32 %v1020, 1.442695
      %v1053 = vpow.pop %v1052
      %v1054 = vmul.f32 %v1021, 1.442695
      %v1055 = vpow.pop %v1054
      %v1056 = vmul.f32 %v1022, 1.442695
      %v1057 = vpow.pop %v1056
      %v1058 = vmul.f32 %v1023, 1.442695
      %v1059 = vpow.pop %v1058
      %v1060 = vmul.f32 %v1024, 1.442695
      %v1061 = vpow.pop %v1060
      %v1062 = vmul.f32 %v1025, 1.442695
      %v1063 = vpow.pop %v1062
      %v1064 = vmul.f32 %v1026, 1.442695
      %v1065 = vpow.pop %v1064
      %v1066 = vmul.f32 %v1027, 1.442695
      %v1067 = vpow.pop %v1066
      %v1068 = vmul.f32 %v1028, 1.442695
      %v1069 = vpow.pop %v1068
      %v1070 = vmul.f32 %v1029, 1.442695
      %v1071 = vpow.pop %v1070
      %v1072 = vmul.f32 %v1030, 1.442695
      %v1073 = vpow.pop %v1072
      %v1074 = vmul.f32 %v1031, 1.442695
      %v1075 = vpow.pop %v1074
      %v1076 = vmul.f32 %v1032, 1.442695
      %v1077 = vpow.pop %v1076
      %v1078 = vmul.f32 %v1033, 1.442695
      %v1079 = vpow.pop %v1078
      %v1080 = vmul.f32 %v1034, 1.442695
      %v1081 = vpow.pop %v1080
      %v1082 = vmul.f32 %v1035, 1.442695
      %v1083 = vpow.pop %v1082
      %v1084 = vmul.f32 %v1036, 1.442695
      %v1085 = vpow.pop %v1084
      %v1086 = vmul.f32 %v1037, 1.442695
      %v1087 = vpow.pop %v1086
      %v1088 = vmul.f32 %v1038, 1.442695
      %v1089 = vpow.pop %v1088
      %v1090 = vmul.f32 %v1039, 1.442695
      %v1091 = vpow.pop %v1090
      %v1092 = vmul.f32 %v1040, 1.442695
      %v1093 = vpow.pop %v1092
      %v1094 = vmul.f32 %v1041, 1.442695
      %v1095 = vpow.pop %v1094
      %v1096 = vmul.f32 %v1042, 1.442695
      %v1097 = vpow.pop %v1096
      %v1098 = vmul.f32 %v1043, 1.442695
      %v1099 = vpow.pop %v1098
      %v1100 = vmul.f32 %v1044, 1.442695
      %v1101 = vpow.pop %v1100
      %v1102 = vmul.f32 %v1045, 1.442695
      %v1103 = vpow.pop %v1102
      %v1104 = vmul.f32 %v1046, 1.442695
      %v1105 = vpow.pop %v1104
      %v1106 = vmul.f32 %v1047, 1.442695
      %v1107 = vpow.pop %v1106
      %v1108 = vmul.f32 %v1048, 1.442695
      %v1109 = vpow.pop %v1108
      %v1110 = vmul.f32 %v1049, 1.442695
      %v1111 = vpow.pop %v1110
      %v1112 = vmul.f32 %v1050, 1.442695
      %v1113 = vpow.pop %v1112
      %v1114 = vmul.f32 %v1051, 1.442695
      %v1115 = vpow.pop %v1114
      %v1116 = vadd.f32 %v1053, 1.0
      %v1117 = vadd.f32 %v1055, 1.0
      %v1118 = vadd.f32 %v1057, 1.0
      %v1119 = vadd.f32 %v1059, 1.0
      %v1120 = vadd.f32 %v1061, 1.0
      %v1121 = vadd.f32 %v1063, 1.0
      %v1122 = vadd.f32 %v1065, 1.0
      %v1123 = vadd.f32 %v1067, 1.0
      %v1124 = vadd.f32 %v1069, 1.0
      %v1125 = vadd.f32 %v1071, 1.0
      %v1126 = vadd.f32 %v1073, 1.0
      %v1127 = vadd.f32 %v1075, 1.0
      %v1128 = vadd.f32 %v1077, 1.0
      %v1129 = vadd.f32 %v1079, 1.0
      %v1130 = vadd.f32 %v1081, 1.0
      %v1131 = vadd.f32 %v1083, 1.0
      %v1132 = vadd.f32 %v1085, 1.0
      %v1133 = vadd.f32 %v1087, 1.0
      %v1134 = vadd.f32 %v1089, 1.0
      %v1135 = vadd.f32 %v1091, 1.0
      %v1136 = vadd.f32 %v1093, 1.0
      %v1137 = vadd.f32 %v1095, 1.0
      %v1138 = vadd.f32 %v1097, 1.0
      %v1139 = vadd.f32 %v1099, 1.0
      %v1140 = vadd.f32 %v1101, 1.0
      %v1141 = vadd.f32 %v1103, 1.0
      %v1142 = vadd.f32 %v1105, 1.0
      %v1143 = vadd.f32 %v1107, 1.0
      %v1144 = vadd.f32 %v1109, 1.0
      %v1145 = vadd.f32 %v1111, 1.0
      %v1146 = vadd.f32 %v1113, 1.0
      %v1147 = vadd.f32 %v1115, 1.0
      %v1148 = vrcp.pop %v1116
      %v1149 = vmul.f32 1.0, %v1148
      %v1150 = vrcp.pop %v1117
      %v1151 = vmul.f32 1.0, %v1150
      %v1152 = vrcp.pop %v1118
      %v1153 = vmul.f32 1.0, %v1152
      %v1154 = vrcp.pop %v1119
      %v1155 = vmul.f32 1.0, %v1154
      %v1156 = vrcp.pop %v1120
      %v1157 = vmul.f32 1.0, %v1156
      %v1158 = vrcp.pop %v1121
      %v1159 = vmul.f32 1.0, %v1158
      %v1160 = vrcp.pop %v1122
      %v1161 = vmul.f32 1.0, %v1160
      %v1162 = vrcp.pop %v1123
      %v1163 = vmul.f32 1.0, %v1162
      %v1164 = vrcp.pop %v1124
      %v1165 = vmul.f32 1.0, %v1164
      %v1166 = vrcp.pop %v1125
      %v1167 = vmul.f32 1.0, %v1166
      %v1168 = vrcp.pop %v1126
      %v1169 = vmul.f32 1.0, %v1168
      %v1170 = vrcp.pop %v1127
      %v1171 = vmul.f32 1.0, %v1170
      %v1172 = vrcp.pop %v1128
      %v1173 = vmul.f32 1.0, %v1172
      %v1174 = vrcp.pop %v1129
      %v1175 = vmul.f32 1.0, %v1174
      %v1176 = vrcp.pop %v1130
      %v1177 = vmul.f32 1.0, %v1176
      %v1178 = vrcp.pop %v1131
      %v1179 = vmul.f32 1.0, %v1178
      %v1180 = vrcp.pop %v1132
      %v1181 = vmul.f32 1.0, %v1180
      %v1182 = vrcp.pop %v1133
      %v1183 = vmul.f32 1.0, %v1182
      %v1184 = vrcp.pop %v1134
      %v1185 = vmul.f32 1.0, %v1184
      %v1186 = vrcp.pop %v1135
      %v1187 = vmul.f32 1.0, %v1186
      %v1188 = vrcp.pop %v1136
      %v1189 = vmul.f32 1.0, %v1188
      %v1190 = vrcp.pop %v1137
      %v1191 = vmul.f32 1.0, %v1190
      %v1192 = vrcp.pop %v1138
      %v1193 = vmul.f32 1.0, %v1192
      %v1194 = vrcp.pop %v1139
      %v1195 = vmul.f32 1.0, %v1194
      %v1196 = vrcp.pop %v1140
      %v1197 = vmul.f32 1.0, %v1196
      %v1198 = vrcp.pop %v1141
      %v1199 = vmul.f32 1.0, %v1198
      %v1200 = vrcp.pop %v1142
      %v1201 = vmul.f32 1.0, %v1200
      %v1202 = vrcp.pop %v1143
      %v1203 = vmul.f32 1.0, %v1202
      %v1204 = vrcp.pop %v1144
      %v1205 = vmul.f32 1.0, %v1204
      %v1206 = vrcp.pop %v1145
      %v1207 = vmul.f32 1.0, %v1206
      %v1208 = vrcp.pop %v1146
      %v1209 = vmul.f32 1.0, %v1208
      %v1210 = vrcp.pop %v1147
      %v1211 = vmul.f32 1.0, %v1210
      %vm1212 = vcmask 7168
      %1213 = vst.msk [vmem:[%s282] sm:$0xff] %vm1212, %v1149
      %1214 = vst.msk [vmem:[%s282 + $0x8] sm:$0xff] %vm1212, %v1151
      %1215 = vst.msk [vmem:[%s282 + $0x10] sm:$0xff] %vm1212, %v1153
      %1216 = vst.msk [vmem:[%s282 + $0x18] sm:$0xff] %vm1212, %v1155
      %1217 = vst.msk [vmem:[%s282 + $0x20] sm:$0xff] %vm1212, %v1157
      %1218 = vst.msk [vmem:[%s282 + $0x28] sm:$0xff] %vm1212, %v1159
      %1219 = vst.msk [vmem:[%s282 + $0x30] sm:$0xff] %vm1212, %v1161
      %1220 = vst.msk [vmem:[%s282 + $0x38] sm:$0xff] %vm1212, %v1163
      %1221 = vst.msk [vmem:[%s282 + $0x40] sm:$0xff] %vm1212, %v1165
      %1222 = vst.msk [vmem:[%s282 + $0x48] sm:$0xff] %vm1212, %v1167
      %1223 = vst.msk [vmem:[%s282 + $0x50] sm:$0xff] %vm1212, %v1169
      %1224 = vst.msk [vmem:[%s282 + $0x58] sm:$0xff] %vm1212, %v1171
      %1225 = vst.msk [vmem:[%s282 + $0x60] sm:$0xff] %vm1212, %v1173
      %1226 = vst.msk [vmem:[%s282 + $0x68] sm:$0xff] %vm1212, %v1175
      %1227 = vst.msk [vmem:[%s282 + $0x70] sm:$0xff] %vm1212, %v1177
      %1228 = vst.msk [vmem:[%s282 + $0x78] sm:$0xff] %vm1212, %v1179
      %1229 = vst.msk [vmem:[%s282 + $0x80] sm:$0xff] %vm1212, %v1181
      %1230 = vst.msk [vmem:[%s282 + $0x88] sm:$0xff] %vm1212, %v1183
      %1231 = vst.msk [vmem:[%s282 + $0x90] sm:$0xff] %vm1212, %v1185
      %1232 = vst.msk [vmem:[%s282 + $0x98] sm:$0xff] %vm1212, %v1187
      %1233 = vst.msk [vmem:[%s282 + $0xa0] sm:$0xff] %vm1212, %v1189
      %1234 = vst.msk [vmem:[%s282 + $0xa8] sm:$0xff] %vm1212, %v1191
      %1235 = vst.msk [vmem:[%s282 + $0xb0] sm:$0xff] %vm1212, %v1193
      %1236 = vst.msk [vmem:[%s282 + $0xb8] sm:$0xff] %vm1212, %v1195
      %1237 = vst.msk [vmem:[%s282 + $0xc0] sm:$0xff] %vm1212, %v1197
      %1238 = vst.msk [vmem:[%s282 + $0xc8] sm:$0xff] %vm1212, %v1199
      %1239 = vst.msk [vmem:[%s282 + $0xd0] sm:$0xff] %vm1212, %v1201
      %1240 = vst.msk [vmem:[%s282 + $0xd8] sm:$0xff] %vm1212, %v1203
      %1241 = vst.msk [vmem:[%s282 + $0xe0] sm:$0xff] %vm1212, %v1205
      %1242 = vst.msk [vmem:[%s282 + $0xe8] sm:$0xff] %vm1212, %v1207
      %1243 = vst.msk [vmem:[%s282 + $0xf0] sm:$0xff] %vm1212, %v1209
      %1244 = vst.msk [vmem:[%s282 + $0xf8] sm:$0xff] %vm1212, %v1211
      %s1245 = smul.u32 32, %s20
      %p1246 = scmp.lt.s32.totalorder %s1245, 127
      %s1247 = scalar_select %p1246, %s1245, 127
      %s1248 = smul.addr %s1247, 8
      %s1249 = scalar_lea.vmem %s7, %s1248
      // Predicated region
      $region49: #{tpu_custom_call.1} parent=47 // pred_check
        %p1250 = pneg %p190
      $region50: #{tpu_custom_call.1} parent=47 // pred_check_branch
        %1252 = sbr.rel (%p1250) target = $region52
      $region51: #{tpu_custom_call.1} parent=47 // pred_region
        %s1253 = smul.u32 32, %s20
      $region52: #{tpu_custom_call.1} parent=47 // pred_fallthru
        _
    $region48: #{tpu_custom_call.1} parent=5 // pred_fallthru
      _
    %p1254 = scmp.le.s32.totalorder 2, %s15
    // Predicated region
    $region53: #{tpu_custom_call.1} parent=5 // pred_check
      %p1255 = pneg %p1254
    $region54: #{tpu_custom_call.1} parent=5 // pred_check_branch
      %1257 = sbr.rel (%p1255) target = $region56
    $region55: #{tpu_custom_call.1} parent=5 // pred_region
      %s1258 = ssub.s32 %s15, 2
      // Predicated region
      $region57: #{tpu_custom_call.1} parent=55 // pred_check
        %p1259 = pneg %p196
      $region58: #{tpu_custom_call.1} parent=55 // pred_check_branch
        %1261 = sbr.rel (%p1259) target = $region60
      $region59: #{tpu_custom_call.1} parent=55 // pred_region
        %s1262 = smul.u32 32, %s21
        %p1263 = scmp.lt.s32.totalorder %s1262, 127
        %s1264 = scalar_select %p1263, %s1262, 127
        %s1265 = smul.addr %s1264, 8
        %s1266 = scalar_lea.vmem %s7, %s1265
      $region60: #{tpu_custom_call.1} parent=55 // pred_fallthru
        _
    $region56: #{tpu_custom_call.1} parent=5 // pred_fallthru
      _
  $region6: #{tpu_custom_call.1} parent=0 // loop_footer
    %s19 = sadd.s32 1, %s15
  $region7: #{tpu_custom_call.1} parent=0 // loop_footer_branch
    %14 = sbr.rel target = $region3
  $region8: #{tpu_custom_call.1} parent=0 // loop_exit
    _

</llo_original>
